<compile_context>
chip_gen: v6e
topology: v6e:2x2x1
jax: 0.10.0
libtpu: 0.0.40
codegen_flags: <defaults>
</compile_context>

<pallas_src>
import functools

import jax
import jax.numpy as jnp
from jax.experimental import pallas as pl
from jax.experimental.pallas import tpu as pltpu


# ----------------------------------------------------------------------------
# helpers
# ----------------------------------------------------------------------------
def _round_up(v: int, m: int) -> int:
    return ((v + m - 1) // m) * m


def _largest_divisor(n: int, cap: int) -> int:
    """Largest d <= cap with n % d == 0 (n, cap are small positive ints)."""
    best = 1
    for d in range(1, min(n, cap) + 1):
        if n % d == 0:
            best = d
    return best


def _pick_tile_units(n_units: int, cap_units: int, prefer_multiple_blocks: bool) -> int:
    """Tile size in 128-granules: largest divisor of n_units <= cap_units.

    If prefer_multiple_blocks, avoid a single-block axis when a proper divisor
    exists (keeps >=2 blocks on a 'parallel' axis so both v7x TCs get work).
    """
    d = _largest_divisor(n_units, cap_units)
    if prefer_multiple_blocks and d == n_units and n_units > 1:
        d = _largest_divisor(n_units, n_units - 1)
    return d


def _bucket_rows(m: int) -> int:
    """Bucket the (flattened) batch dim to a small set of padded sizes to
    bound recompiles: pow2 up to 128, then multiples of 128."""
    if m <= 16:
        return 16
    if m <= 128:
        return 1 << (m - 1).bit_length()
    return _round_up(m, 128)


# ----------------------------------------------------------------------------
# kernels
# ----------------------------------------------------------------------------
def _mm_kernel(x_ref, w_ref, o_ref, acc_ref):
    """Multi-K-step tile: f32 accumulator resident across grid axis 2."""
    k = pl.program_id(2)

    @pl.when(k == 0)
    def _():
        acc_ref[...] = jnp.zeros_like(acc_ref)

    acc_ref[...] += jnp.dot(x_ref[...], w_ref[...],
                            preferred_element_type=jnp.float32)

    @pl.when(k == pl.num_programs(2) - 1)
    def _():
        o_ref[...] = acc_ref[...].astype(o_ref.dtype)


def _mm_bias_kernel(x_ref, w_ref, b_ref, o_ref, acc_ref):
    """Multi-K-step tile with bias folded into the epilogue."""
    k = pl.program_id(2)

    @pl.when(k == 0)
    def _():
        acc_ref[...] = jnp.zeros_like(acc_ref)

    acc_ref[...] += jnp.dot(x_ref[...], w_ref[...],
                            preferred_element_type=jnp.float32)

    @pl.when(k == pl.num_programs(2) - 1)
    def _():
        o_ref[...] = (acc_ref[...]
                      + b_ref[...].astype(jnp.float32)).astype(o_ref.dtype)


def _mm_kernel_1k(x_ref, w_ref, o_ref):
    """Single-K-step specialization: no scratch, no accumulate RMW."""
    o_ref[...] = jnp.dot(x_ref[...], w_ref[...],
                         preferred_element_type=jnp.float32).astype(o_ref.dtype)


def _mm_bias_kernel_1k(x_ref, w_ref, b_ref, o_ref):
    acc = jnp.dot(x_ref[...], w_ref[...], preferred_element_type=jnp.float32)
    o_ref[...] = (acc + b_ref[...].astype(jnp.float32)).astype(o_ref.dtype)


# ----------------------------------------------------------------------------
# pallas_call wrapper
# ----------------------------------------------------------------------------
def _pallas_matmul(x, w_t, bias_row, *, tm, tn, tk, out_dtype):
    """x: (Mp, Kp) bf16, w_t: (Kp, Np) bf16, bias_row: (1, Np) f32 or None."""
    Mp, Kp = x.shape
    Kp2, Np = w_t.shape
    assert Kp == Kp2
    assert Mp % tm == 0 and Np % tn == 0 and Kp % tk == 0

    ni, nj, nk = Mp // tm, Np // tn, Kp // tk
    has_bias = bias_row is not None

    in_itemsize = jnp.dtype(x.dtype).itemsize
    bytes_accessed = (Mp * Kp * nj + Kp * Np * ni) * in_itemsize \
        + Mp * Np * jnp.dtype(out_dtype).itemsize
    if has_bias:
        bytes_accessed += Np * 4
    cost = pl.CostEstimate(flops=2 * Mp * Np * Kp, transcendentals=0,
                           bytes_accessed=bytes_accessed)

    if nk == 1:
        # Whole K reduction in one MXU pass -> write straight to the output.
        grid = (ni, nj)
        in_specs = [
            pl.BlockSpec((tm, Kp), lambda i, j: (i, 0)),
            pl.BlockSpec((Kp, tn), lambda i, j: (0, j)),
        ]
        args = [x, w_t]
        if has_bias:
            in_specs.append(pl.BlockSpec((1, tn), lambda i, j: (0, j)))
            args.append(bias_row)
            kernel = _mm_bias_kernel_1k
        else:
            kernel = _mm_kernel_1k
        out_specs = pl.BlockSpec((tm, tn), lambda i, j: (i, j))
        scratch_shapes = []
        dim_sem = ("parallel", "parallel")
    else:
        grid = (ni, nj, nk)
        in_specs = [
            pl.BlockSpec((tm, tk), lambda i, j, k: (i, k)),
            pl.BlockSpec((tk, tn), lambda i, j, k: (k, j)),
        ]
        args = [x, w_t]
        if has_bias:
            in_specs.append(pl.BlockSpec((1, tn), lambda i, j, k: (0, j)))
            args.append(bias_row)
            kernel = _mm_bias_kernel
        else:
            kernel = _mm_kernel
        out_specs = pl.BlockSpec((tm, tn), lambda i, j, k: (i, j))
        scratch_shapes = [pltpu.VMEM((tm, tn), jnp.float32)]
        dim_sem = ("parallel", "parallel", "arbitrary")

    return pl.pallas_call(
        kernel,
        out_shape=jax.ShapeDtypeStruct((Mp, Np), out_dtype),
        grid_spec=pltpu.PrefetchScalarGridSpec(
            num_scalar_prefetch=0,
            grid=grid,
            in_specs=in_specs,
            out_specs=out_specs,
            scratch_shapes=scratch_shapes,
        ),
        compiler_params=pltpu.CompilerParams(
            dimension_semantics=dim_sem,
            vmem_limit_bytes=32 * 1024 * 1024,
        ),
        cost_estimate=cost,
    )(*args)


@functools.partial(
    jax.jit, static_argnames=("tm", "tn", "tk", "m_pad", "n_out", "out_dtype"))
def _column_parallel_forward(x2d, w_t, bias_row, *, tm, tn, tk, m_pad, n_out,
                             out_dtype):
    """pad + cast + matmul(+bias) + slice, all inside one jit so the pad/cast
    fuse into a single pass over x."""
    M, K = x2d.shape
    Kp, Np = w_t.shape

    x = x2d
    if m_pad != M or Kp != K:
        x = jnp.pad(x, ((0, m_pad - M), (0, Kp - K)))
    x = x.astype(w_t.dtype)  # bf16 for the MXU

    out = _pallas_matmul(x, w_t, bias_row, tm=tm, tn=tn, tk=tk,
                         out_dtype=out_dtype)

    if m_pad != M or Np != n_out:
        out = out[:M, :n_out]
    return out


# ----------------------------------------------------------------------------
# module
# ----------------------------------------------------------------------------
class ColumnParallelLinear:
    """JAX/Pallas port of aphrodite's ColumnParallelLinear (tp_size = 1)."""

    # Tile caps in 128-granules: tm<=512, tn<=512, tk<=1024.
    _TM_MAX_U = 4
    _TN_MAX_U = 4
    _TK_MAX_U = 8

    def __init__(
        self,
        input_size: int,
        output_size: int,
        bias: bool = True,
        gather_output: bool = False,
        skip_bias_add: bool = False,
        params_dtype=jnp.float32,
        compute_dtype=jnp.bfloat16,
        key=None,
    ):
        self.input_size = input_size
        self.output_size = output_size
        self.gather_output = gather_output  # no-op: single device
        self.skip_bias_add = skip_bias_add
        self.params_dtype = params_dtype
        self.compute_dtype = compute_dtype
        self.output_size_per_partition = output_size  # tp_size == 1

        if key is None:
            key = jax.random.PRNGKey(0)
        wkey, bkey = jax.random.split(key)
        # Deterministic synthetic weights; torch layout (out, in).
        self.weight = (
            jax.random.normal(wkey, (output_size, input_size), dtype=jnp.float32)
            * 0.02
        ).astype(params_dtype)
        if bias:
            self.bias = (
                jax.random.normal(bkey, (output_size,), dtype=jnp.float32) * 0.02
            ).astype(params_dtype)
        else:
            self.bias = None

        # ---- One-time kernel-side preparation (N, K static per layer) ----
        # Pad only to 128-granules; tiles are exact divisors of the padded dims.
        self._Kp = _round_up(input_size, 128)
        self._Np = _round_up(output_size, 128)
        self._tk = 128 * _pick_tile_units(self._Kp // 128, self._TK_MAX_U, False)
        self._tn = 128 * _pick_tile_units(self._Np // 128, self._TN_MAX_U, True)

        # Pre-transpose to (K, N) once, pad with zeros, store in bf16 so the
        # MXU runs bf16 with an f32 accumulator.
        w_t = self.weight.astype(jnp.float32).T
        if (self._Kp, self._Np) != (input_size, output_size):
            w_t = jnp.pad(
                w_t,
                ((0, self._Kp - input_size), (0, self._Np - output_size)),
            )
        self._weight_t = w_t.astype(compute_dtype)

        if self.bias is not None:
            b = self.bias.astype(jnp.float32)
            if self._Np != output_size:
                b = jnp.pad(b, (0, self._Np - output_size))
            self._bias_row = b.reshape(1, self._Np)
        else:
            self._bias_row = None

    def _pick_tm(self, m_pad: int) -> int:
        if m_pad <= 128:
            return m_pad
        return 128 * _pick_tile_units(m_pad // 128, self._TM_MAX_U, False)

    def __call__(self, input_):
        *lead, K = input_.shape
        assert K == self.input_size
        M = 1
        for d in lead:
            M *= d
        x2d = input_.reshape(M, K)

        m_pad = _bucket_rows(M)
        tm = self._pick_tm(m_pad)

        # Bias folded into the kernel epilogue unless skip_bias_add.
        bias_row = None if self.skip_bias_add else self._bias_row

        out2d = _column_parallel_forward(
            x2d,
            self._weight_t,
            bias_row,
            tm=tm,
            tn=self._tn,
            tk=self._tk,
            m_pad=m_pad,
            n_out=self.output_size_per_partition,
            out_dtype=jnp.dtype(input_.dtype),
        )

        output = out2d.reshape(*lead, self.output_size_per_partition)

        # gather_output would all-gather across TP ranks; tp_size == 1 -> identity.
        output_bias = self.bias if self.skip_bias_add else None
        return output, output_bias


# ----------------------------------------------------------------------------
# self-test
# ----------------------------------------------------------------------------
if __name__ == "__main__":
    key = jax.random.PRNGKey(0)
    kx, kp, kr, km = jax.random.split(key, 4)

    def _bf16_round(a):
        return a.astype(jnp.bfloat16).astype(jnp.float32)

    def _ref_matmul(x, w):
        # High-precision reference on bf16-rounded operands (matches the
        # kernel's bf16-in / f32-accumulate numerics).
        return jnp.einsum("...k,nk->...n", _bf16_round(x), _bf16_round(w),
                          precision=jax.lax.Precision.HIGHEST)

    TOL = dict(atol=1e-2, rtol=1e-2)

    # --- Fused-bias path (single-K-step specialization, tn split for 2 TCs) ---
    batch, seq, hidden, out = 2, 8, 256, 256
    x = jax.random.normal(kx, (batch, seq, hidden), dtype=jnp.float32)
    layer = ColumnParallelLinear(hidden, out, bias=True, skip_bias_add=False, key=kp)
    y, y_bias = layer(x)
    y = jax.block_until_ready(y)
    ref = _ref_matmul(x, layer.weight) + layer.bias
    assert y.shape == (batch, seq, out)
    assert y_bias is None
    assert jnp.allclose(y, ref, **TOL)

    # --- skip_bias_add path (no bias in kernel, bias returned separately) ---
    layer2 = ColumnParallelLinear(hidden, out, bias=True, skip_bias_add=True, key=kp)
    y2, y2_bias = layer2(x)
    y2 = jax.block_until_ready(y2)
    ref2 = _ref_matmul(x, layer2.weight)
    assert jnp.allclose(y2, ref2, **TOL)
    assert y2_bias is not None and y2_bias.shape == (out,)

    # --- Ragged M / K / N (200 -> 300): exercises 128-granule padding path ---
    layer_r = ColumnParallelLinear(200, 300, bias=True, key=kr)
    x3 = jax.random.normal(kx, (3, 200), dtype=jnp.float32)
    y3, _ = layer_r(x3)
    y3 = jax.block_until_ready(y3)
    ref3 = _ref_matmul(x3, layer_r.weight) + layer_r.bias
    assert y3.shape == (3, 300)
    assert jnp.allclose(y3, ref3, **TOL)

    # --- Multi-K-step accumulator path (K=1152 -> tk=384, 3 K steps), no bias ---
    layer_m = ColumnParallelLinear(1152, 256, bias=False, key=km)
    x4 = jax.random.normal(kx, (4, 1152), dtype=jnp.float32)
    y4, y4_bias = layer_m(x4)
    y4 = jax.block_until_ready(y4)
    ref4 = _ref_matmul(x4, layer_m.weight)
    assert y4_bias is None
    assert jnp.allclose(y4, ref4, **TOL)

    print("KERNEL_OK")
</pallas_src>

<mosaic_0001>
module attributes {stable_mosaic.version = 11 : i64} {
  func.func @_mm_bias_kernel_1k(%arg0: i32, %arg1: i32, %arg2: memref<16x256xbf16, #tpu.memory_space<vmem>>, %arg3: memref<256x128xbf16, #tpu.memory_space<vmem>>, %arg4: memref<1x128xf32, #tpu.memory_space<vmem>>, %arg5: memref<16x128xf32, #tpu.memory_space<vmem>>) attributes {dimension_semantics = [#tpu.dimension_semantics<parallel>, #tpu.dimension_semantics<parallel>], iteration_bounds = array<i64: 1, 2>, scalar_prefetch = 0 : i64, scratch_operands = 0 : i64, tpu.core_type = #tpu.core_type<tc>, window_params = [{transform_indices = @transform_0, window_bounds = array<i64: 16, 256>}, {transform_indices = @transform_1, window_bounds = array<i64: 256, 128>}, {transform_indices = @transform_2, window_bounds = array<i64: 1, 128>}, {transform_indices = @transform_3, window_bounds = array<i64: 16, 128>}]} {
    %c0 = arith.constant 0 : index
    %c0_0 = arith.constant 0 : index
    %0 = vector.load %arg2[%c0, %c0_0] : memref<16x256xbf16, #tpu.memory_space<vmem>>, vector<16x256xbf16>
    %c0_1 = arith.constant 0 : index
    %c0_2 = arith.constant 0 : index
    %1 = vector.load %arg3[%c0_1, %c0_2] : memref<256x128xbf16, #tpu.memory_space<vmem>>, vector<256x128xbf16>
    %cst = arith.constant dense<0.000000e+00> : vector<16x128xf32>
    %2 = tpu.matmul %0, %1, %cst {dimension_numbers = #tpu.dot_dimension_numbers<[1], [0], [0], [1], [0, 0, 1, 1], [], []>} : vector<16x256xbf16>, vector<256x128xbf16>, vector<16x128xf32> -> vector<16x128xf32>
    %c0_3 = arith.constant 0 : index
    %c0_4 = arith.constant 0 : index
    %3 = vector.load %arg4[%c0_3, %c0_4] : memref<1x128xf32, #tpu.memory_space<vmem>>, vector<1x128xf32>
    %4 = vector.broadcast %3 : vector<1x128xf32> to vector<16x128xf32>
    %5 = arith.addf %2, %4 : vector<16x128xf32>
    %c0_5 = arith.constant 0 : index
    %c0_6 = arith.constant 0 : index
    %6 = vector.load %arg5[%c0_5, %c0_6] : memref<16x128xf32, #tpu.memory_space<vmem>>, vector<16x128xf32>
    tpu.vector_store %arg5[%c0_5, %c0_6], %5 {strides = array<i32>} : memref<16x128xf32, #tpu.memory_space<vmem>>, vector<16x128xf32>,
    return
  }
  func.func @transform_0(%arg0: i32, %arg1: i32) -> (i32, i32) {
    %c0_i32 = arith.constant 0 : i32
    %c0_i32_0 = arith.constant 0 : i32
    return %arg0, %c0_i32 : i32, i32
  }
  func.func @transform_1(%arg0: i32, %arg1: i32) -> (i32, i32) {
    %c0_i32 = arith.constant 0 : i32
    %c0_i32_0 = arith.constant 0 : i32
    return %c0_i32, %arg1 : i32, i32
  }
  func.func @transform_2(%arg0: i32, %arg1: i32) -> (i32, i32) {
    %c0_i32 = arith.constant 0 : i32
    %c0_i32_0 = arith.constant 0 : i32
    return %c0_i32, %arg1 : i32, i32
  }
  func.func @transform_3(%arg0: i32, %arg1: i32) -> (i32, i32) {
    %c0_i32 = arith.constant 0 : i32
    return %arg0, %arg1 : i32, i32
  }
}

</mosaic_0001>

<llo_original>
// kernel: _column_parallel_forward.1
$region0: #{_column_parallel_forward.1}
  #allocation0 [shape = 'u32[]', space=smem, size = 0x4, offset = 0x4, fixed_abs, tag = 'smem constant byte address 0x4 - core index']
  #allocation1 [shape = 'u32[144,128]{1,0:T(1,128)}', space=vmem, size = 0x12000, scoped, tag = 'internal scratch']
  %s0 = inlined_call_operand.vmem [shape: bf16[16,256], index: 0, kind: input, shape index: {}]
  %s1 = inlined_call_operand.hbm [shape: bf16[256,256], index: 1, kind: input, shape index: {}]
  %s2 = inlined_call_operand.vmem [shape: f32[1,256], index: 2, kind: input, shape index: {}]
  %s3 = inlined_call_operand.hbm [shape: f32[16,256], index: 3, kind: output, shape index: {}]
  %s4 = sld [smem:[#allocation0]]
  $region49: #{_column_parallel_forward.1} parent=0
    _
  %s6 = ssub.s32 1, %s4
  %s7 = scalar_select 0, %s6, %s4
  $region1: #{_column_parallel_forward.1} parent=0
    #allocation2 [shape = 'u8[131072]{0}', space=vmem, size = 0x20000, scoped, tag = 'input window, operand 1']
    #allocation3 [shape = 's32[2]{0}', space=sflag, size = 0x8, scoped, tag = 'scoped memory for _column_parallel_forward.1']
    #allocation4 [shape = 's32[2]{0}', space=sflag, size = 0x8, scoped, tag = 'scoped memory for _column_parallel_forward.1']
    #allocation5 [shape = 'u8[16384]{0}', space=vmem, size = 0x4000, scoped, tag = 'output window, operand 0']
    %8 = vsyncpa [#allocation3], 0
    %s9 = scalar_lea.sflag [#allocation3], 1
    %10 = vsyncpa %s9, 0
    %11 = vsyncpa [#allocation4], 0
    %s12 = scalar_lea.sflag [#allocation4], 1
    %13 = vsyncpa %s12, 0
    loop: start=0, step=1, limit=4
    $region2: #{_column_parallel_forward.1} parent=1 // loop_pre_header
      _
    $region3: #{_column_parallel_forward.1} parent=1 // loop_header
      %s15 = sphi 0, %s19
      %p16 = scmp.ge.s32.totalorder %s15, 4
      %s22 = sphi 0, %s34
      %s23 = sphi 0, %s30
      %s24 = sphi 0, %s22
      %s25 = sphi 0, %s23
      %s26 = sphi 0, %s24
      %s27 = sphi 0, %s25
      %s37 = sphi 0, %s39
      %s40 = sphi 0, %s37
      %s41 = sphi 0, %s40
      %s57 = sphi 0, %s41
      %s63 = sphi 0, %s65
      %s66 = sphi 0, %s63
      %s67 = sphi 0, %s66
      %s83 = sphi 0, %s67
      %s89 = sphi 0, %s91
      %s92 = sphi 0, %s89
      %s93 = sphi 0, %s92
      %s109 = sphi 0, %s93
      %s117 = sphi 0, %s119
      %s120 = sphi 0, %s117
      %s121 = sphi 0, %s120
      %s137 = sphi 0, %s121
    $region4: #{_column_parallel_forward.1} parent=1 // loop_header_branch
      %18 = sbr.rel (%p16) target = $region8
    $region5: #{_column_parallel_forward.1} parent=1 // loop_body
      %s20 = ssub.s32 %s15, 1
      %s21 = ssub.s32 %s15, 2
      %s28 = sadd.s32 1, %s23
      %p29 = scmp.ge.s32.totalorder %s28, 2
      %s30 = scalar_select %p29, 0, %s28
      %s31 = sadd.s32 1, %s22
      %s32 = scalar_select %p29, %s31, %s22
      %p33 = scmp.ge.s32.totalorder %s32, 1
      %s34 = scalar_select %p33, 0, %s32
      %s35 = ssub.s32 %s22, %s34
      %p36 = scmp.eq.s32.totalorder %s35, 0
      %s38 = sadd.s32 %s37, 1
      %s39 = scalar_select %p36, %s37, %s38
      %p42 = pneg %p36
      %p43 = scmp.eq.s32.totalorder %s15, 1
      %p44 = por %p42, %p43
      %p45 = scmp.ne.s32.totalorder %s37, %s40
      %p46 = scmp.eq.s32.totalorder %s15, 0
      %p47 = por %p45, %p46
      %p48 = scmp.ne.s32.totalorder %s37, %s40
      %p49 = scmp.eq.s32.totalorder %s20, 1
      %p50 = por %p48, %p49
      %p51 = scmp.ne.s32.totalorder %s40, %s41
      %p52 = scmp.eq.s32.totalorder %s20, 0
      %p53 = por %p51, %p52
      %p54 = scmp.ne.s32.totalorder %s40, %s41
      %p55 = scmp.eq.s32.totalorder %s21, 1
      %p56 = por %p54, %p55
      %p58 = scmp.ne.s32.totalorder %s41, %s57
      %p59 = scmp.eq.s32.totalorder %s21, 0
      %p60 = por %p58, %p59
      %s61 = ssub.s32 %s23, %s30
      %p62 = scmp.eq.s32.totalorder %s61, 0
      %s64 = sadd.s32 %s63, 1
      %s65 = scalar_select %p62, %s63, %s64
      %p68 = pneg %p62
      %p69 = scmp.eq.s32.totalorder %s15, 1
      %p70 = por %p68, %p69
      %p71 = scmp.ne.s32.totalorder %s63, %s66
      %p72 = scmp.eq.s32.totalorder %s15, 0
      %p73 = por %p71, %p72
      %p74 = scmp.ne.s32.totalorder %s63, %s66
      %p75 = scmp.eq.s32.totalorder %s20, 1
      %p76 = por %p74, %p75
      %p77 = scmp.ne.s32.totalorder %s66, %s67
      %p78 = scmp.eq.s32.totalorder %s20, 0
      %p79 = por %p77, %p78
      %p80 = scmp.ne.s32.totalorder %s66, %s67
      %p81 = scmp.eq.s32.totalorder %s21, 1
      %p82 = por %p80, %p81
      %p84 = scmp.ne.s32.totalorder %s67, %s83
      %p85 = scmp.eq.s32.totalorder %s21, 0
      %p86 = por %p84, %p85
      %s87 = ssub.s32 %s23, %s30
      %p88 = scmp.eq.s32.totalorder %s87, 0
      %s90 = sadd.s32 %s89, 1
      %s91 = scalar_select %p88, %s89, %s90
      %p94 = pneg %p88
      %p95 = scmp.eq.s32.totalorder %s15, 1
      %p96 = por %p94, %p95
      %p97 = scmp.ne.s32.totalorder %s89, %s92
      %p98 = scmp.eq.s32.totalorder %s15, 0
      %p99 = por %p97, %p98
      %p100 = scmp.ne.s32.totalorder %s89, %s92
      %p101 = scmp.eq.s32.totalorder %s20, 1
      %p102 = por %p100, %p101
      %p103 = scmp.ne.s32.totalorder %s92, %s93
      %p104 = scmp.eq.s32.totalorder %s20, 0
      %p105 = por %p103, %p104
      %p106 = scmp.ne.s32.totalorder %s92, %s93
      %p107 = scmp.eq.s32.totalorder %s21, 1
      %p108 = por %p106, %p107
      %p110 = scmp.ne.s32.totalorder %s93, %s109
      %p111 = scmp.eq.s32.totalorder %s21, 0
      %p112 = por %p110, %p111
      %s113 = ssub.s32 %s22, %s34
      %s114 = ssub.s32 %s23, %s30
      %s115 = sor.u32 %s113, %s114
      %p116 = scmp.eq.s32.totalorder %s115, 0
      %s118 = sadd.s32 %s117, 1
      %s119 = scalar_select %p116, %s117, %s118
      %p122 = pneg %p116
      %p123 = scmp.eq.s32.totalorder %s15, 1
      %p124 = por %p122, %p123
      %p125 = scmp.ne.s32.totalorder %s117, %s120
      %p126 = scmp.eq.s32.totalorder %s15, 0
      %p127 = por %p125, %p126
      %p128 = scmp.ne.s32.totalorder %s117, %s120
      %p129 = scmp.eq.s32.totalorder %s20, 1
      %p130 = por %p128, %p129
      %p131 = scmp.ne.s32.totalorder %s120, %s121
      %p132 = scmp.eq.s32.totalorder %s20, 0
      %p133 = por %p131, %p132
      %p134 = scmp.ne.s32.totalorder %s120, %s121
      %p135 = scmp.eq.s32.totalorder %s21, 1
      %p136 = por %p134, %p135
      %p138 = scmp.ne.s32.totalorder %s121, %s137
      %p139 = scmp.eq.s32.totalorder %s21, 0
      %p140 = por %p138, %p139
      %p141 = scmp.le.s32.totalorder 1, %s15
      %p142 = scmp.lt.s32.totalorder %s15, 3
      %p143 = pnand %p141, %p142
      %p144 = pneg %p143
      // Predicated region
      $region9: #{_column_parallel_forward.1} parent=5 // pred_check
        _
      $region10: #{_column_parallel_forward.1} parent=5 // pred_check_branch
        %146 = sbr.rel (%p143) target = $region12
      $region11: #{_column_parallel_forward.1} parent=5 // pred_region
        %s147 = ssub.s32 %s15, 1
        // Predicated region
        $region13: #{_column_parallel_forward.1} parent=11 // pred_check
          %p148 = pneg %p53
        $region14: #{_column_parallel_forward.1} parent=11 // pred_check_branch
          %150 = sbr.rel (%p148) target = $region16
        $region15: #{_column_parallel_forward.1} parent=11 // pred_region
          %s151 = smul.u32 2, %s24
          %p152 = scmp.lt.s32.totalorder %s151, 1
          %s153 = scalar_select %p152, %s151, 1
          %s154 = smul.addr %s153, 2
          %s155 = smul.addr %s154, 4
          %s156 = scalar_lea.vmem %s0, %s155
          %s157 = smul.u32 2, %s24
        $region16: #{_column_parallel_forward.1} parent=11 // pred_fallthru
          _
      $region12: #{_column_parallel_forward.1} parent=5 // pred_fallthru
        _
      %p158 = scmp.lt.s32.totalorder %s15, 2
      // Predicated region
      $region17: #{_column_parallel_forward.1} parent=5 // pred_check
        %p159 = pneg %p158
      $region18: #{_column_parallel_forward.1} parent=5 // pred_check_branch
        %161 = sbr.rel (%p159) target = $region20
      $region19: #{_column_parallel_forward.1} parent=5 // pred_region
        // Predicated region
        $region21: #{_column_parallel_forward.1} parent=19 // pred_check
          %p162 = pneg %p73
        $region22: #{_column_parallel_forward.1} parent=19 // pred_check_branch
          %164 = sbr.rel (%p162) target = $region24
        $region23: #{_column_parallel_forward.1} parent=19 // pred_region
          %s165 = sand.u32 %s63, 1
          %s166 = scalar_lea.sflag [#allocation3], %s165
          %s167 = sand.u32 %s63, 1
          %s168 = smul.addr %s167, 128
          %s169 = scalar_lea.vmem [#allocation2], %s168
          %s171 = ssub.s32 2048, 2048
          %172 = vsyncadd %s166, %s171
          %s173 = smul.addr %s23, 64
          %s174 = scalar_lea.hbm %s1, %s173
          %s175 = sshll.u32 %s169, 4
          %s176 = int_to_ptr.vmem [resolvable:$true] %s175
          %181 = dma.hbm_to_vmem [thread:$0]  %s174, 2048, %s176, %s166, 128, 64, 4
        $region24: #{_column_parallel_forward.1} parent=19 // pred_fallthru
          _
        // Predicated region
        $region25: #{_column_parallel_forward.1} parent=19 // pred_check
          %p182 = pneg %p99
        $region26: #{_column_parallel_forward.1} parent=19 // pred_check_branch
          %184 = sbr.rel (%p182) target = $region28
        $region27: #{_column_parallel_forward.1} parent=19 // pred_region
          %p185 = scmp.lt.s32.totalorder %s23, 1
          %s186 = scalar_select %p185, %s23, 1
          %s187 = scalar_lea.vmem %s2, %s186
        $region28: #{_column_parallel_forward.1} parent=19 // pred_fallthru
          _
      $region20: #{_column_parallel_forward.1} parent=5 // pred_fallthru
        _
      %p188 = scmp.le.s32.totalorder 1, %s15
      %p189 = scmp.lt.s32.totalorder %s15, 3
      %p190 = pnand %p188, %p189
      %p191 = pneg %p190
      // Predicated region
      $region29: #{_column_parallel_forward.1} parent=5 // pred_check
        _
      $region30: #{_column_parallel_forward.1} parent=5 // pred_check_branch
        %193 = sbr.rel (%p190) target = $region32
      $region31: #{_column_parallel_forward.1} parent=5 // pred_region
        %s194 = ssub.s32 %s15, 1
        %s195 = sand.u32 %s66, 1
        %s196 = scalar_lea.sflag [#allocation3], %s195
        %s197 = sand.u32 %s66, 1
        %s198 = smul.addr %s197, 128
        %s199 = scalar_lea.vmem [#allocation2], %s198
        // Predicated region
        $region33: #{_column_parallel_forward.1} parent=31 // pred_check
          %p200 = pneg %p79
        $region34: #{_column_parallel_forward.1} parent=31 // pred_check_branch
          %202 = sbr.rel (%p200) target = $region36
        $region35: #{_column_parallel_forward.1} parent=31 // pred_region
          %203 = dma.done %s196, 2048
        $region36: #{_column_parallel_forward.1} parent=31 // pred_fallthru
          _
        %s204 = smul.u32 2, %s24
        %p205 = scmp.lt.s32.totalorder %s204, 1
        %s206 = scalar_select %p205, %s204, 1
        %s207 = smul.addr %s206, 2
        %s208 = smul.addr %s207, 4
        %s209 = scalar_lea.vmem %s0, %s208
        %p210 = pneg %p53
        %p211 = pneg %p50
        %s212 = sand.u32 %s66, 1
        %s213 = scalar_lea.sflag [#allocation3], %s212
        %s214 = sand.u32 %s66, 1
        %s215 = smul.addr %s214, 128
        %s216 = scalar_lea.vmem [#allocation2], %s215
        %p217 = pneg %p79
        %p218 = pneg %p76
        %p219 = scmp.lt.s32.totalorder %s25, 1
        %s220 = scalar_select %p219, %s25, 1
        %s221 = scalar_lea.vmem %s2, %s220
        %p222 = pneg %p105
        %p223 = pneg %p102
        %p224 = pneg %p133
        %p225 = pneg %p130
        %s226 = sand.u32 %s120, 1
        %s227 = scalar_lea.sflag [#allocation4], %s226
        %s228 = sand.u32 %s120, 1
        %s229 = smul.addr %s228, 16
        %s230 = scalar_lea.vmem [#allocation5], %s229
        %s231 = smul.u32 2, %s24
        %p232 = scmp.lt.s32.totalorder %s231, 1
        %s233 = scalar_select %p232, %s231, 1
        %s234 = smul.addr %s233, 2
        %s235 = smul.addr %s234, 4
        %s236 = scalar_lea.vmem %s0, %s235
        %s237 = smul.u32 2, %s24
        %p238 = scmp.lt.s32.totalorder %s25, 1
        %s239 = scalar_select %p238, %s25, 1
        %s240 = scalar_lea.vmem %s2, %s239
        %s241 = smul.u32 2, %s24
        %v243 = vld [vmem:[%s236] sm:$0xff]
        %v244 = vld [vmem:[%s236 + $0x8] sm:$0xff]
        %v245 = vld [vmem:[%s199] sm:$0xf]
        %v246 = vld [vmem:[%s199 + $0x4] sm:$0xf]
        %v247 = vld [vmem:[%s199 + $0x8] sm:$0xf]
        %v248 = vld [vmem:[%s199 + $0xc] sm:$0xf]
        %v249 = vld [vmem:[%s199 + $0x10] sm:$0xf]
        %v250 = vld [vmem:[%s199 + $0x14] sm:$0xf]
        %v251 = vld [vmem:[%s199 + $0x18] sm:$0xf]
        %v252 = vld [vmem:[%s199 + $0x1c] sm:$0xf]
        %v253 = vld [vmem:[%s199 + $0x20] sm:$0xf]
        %v254 = vld [vmem:[%s199 + $0x24] sm:$0xf]
        %v255 = vld [vmem:[%s199 + $0x28] sm:$0xf]
        %v256 = vld [vmem:[%s199 + $0x2c] sm:$0xf]
        %v257 = vld [vmem:[%s199 + $0x30] sm:$0xf]
        %v258 = vld [vmem:[%s199 + $0x34] sm:$0xf]
        %v259 = vld [vmem:[%s199 + $0x38] sm:$0xf]
        %v260 = vld [vmem:[%s199 + $0x3c] sm:$0xf]
        %v261 = vld [vmem:[%s199 + $0x40] sm:$0xf]
        %v262 = vld [vmem:[%s199 + $0x44] sm:$0xf]
        %v263 = vld [vmem:[%s199 + $0x48] sm:$0xf]
        %v264 = vld [vmem:[%s199 + $0x4c] sm:$0xf]
        %v265 = vld [vmem:[%s199 + $0x50] sm:$0xf]
        %v266 = vld [vmem:[%s199 + $0x54] sm:$0xf]
        %v267 = vld [vmem:[%s199 + $0x58] sm:$0xf]
        %v268 = vld [vmem:[%s199 + $0x5c] sm:$0xf]
        %v269 = vld [vmem:[%s199 + $0x60] sm:$0xf]
        %v270 = vld [vmem:[%s199 + $0x64] sm:$0xf]
        %v271 = vld [vmem:[%s199 + $0x68] sm:$0xf]
        %v272 = vld [vmem:[%s199 + $0x6c] sm:$0xf]
        %v273 = vld [vmem:[%s199 + $0x70] sm:$0xf]
        %v274 = vld [vmem:[%s199 + $0x74] sm:$0xf]
        %v275 = vld [vmem:[%s199 + $0x78] sm:$0xf]
        %v276 = vld [vmem:[%s199 + $0x7c] sm:$0xf]
        %v277 = vld [vmem:[%s240] sm:$0x1]
        %v279 = vlaneseq
        %v280 = vshrl.u32 %v279, 7
        %v281 = vsub.s32 0, %v280
        %v282 = vrot.slane %v277, %v281
        %v286 = vunpack.c.l.b16 %v243
        %v287 = vunpack.c.h.b16 %v243
        %v288 = vunpack.c.l.b16 %v244
        %v289 = vunpack.c.h.b16 %v244
        %v290 = vpack.c.b16 %v288, %v286
        %v291 = vpack.c.b16 %v289, %v287
        %v326 = vunpack.c.l.b16 %v245
        %v327 = vunpack.c.l.b16 %v246
        %v328 = vunpack.c.l.b16 %v247
        %v329 = vunpack.c.l.b16 %v248
        %v330 = vunpack.c.l.b16 %v249
        %v331 = vunpack.c.l.b16 %v250
        %v332 = vunpack.c.l.b16 %v251
        %v333 = vunpack.c.l.b16 %v252
        %v334 = vunpack.c.l.b16 %v253
        %v335 = vunpack.c.l.b16 %v254
        %v336 = vunpack.c.l.b16 %v255
        %v337 = vunpack.c.l.b16 %v256
        %v338 = vunpack.c.l.b16 %v257
        %v339 = vunpack.c.l.b16 %v258
        %v340 = vunpack.c.l.b16 %v259
        %v341 = vunpack.c.l.b16 %v260
        %v342 = vunpack.c.l.b16 %v261
        %v343 = vunpack.c.l.b16 %v262
        %v344 = vunpack.c.l.b16 %v263
        %v345 = vunpack.c.l.b16 %v264
        %v346 = vunpack.c.l.b16 %v265
        %v347 = vunpack.c.l.b16 %v266
        %v348 = vunpack.c.l.b16 %v267
        %v349 = vunpack.c.l.b16 %v268
        %v350 = vunpack.c.l.b16 %v269
        %v351 = vunpack.c.l.b16 %v270
        %v352 = vunpack.c.l.b16 %v271
        %v353 = vunpack.c.l.b16 %v272
        %v354 = vunpack.c.l.b16 %v273
        %v355 = vunpack.c.l.b16 %v274
        %v356 = vunpack.c.l.b16 %v275
        %v357 = vunpack.c.l.b16 %v276
        %v358 = vpack.c.b16 %v327, %v326
        %v359 = vpack.c.b16 %v329, %v328
        %v360 = vpack.c.b16 %v331, %v330
        %v361 = vpack.c.b16 %v333, %v332
        %v362 = vpack.c.b16 %v335, %v334
        %v363 = vpack.c.b16 %v337, %v336
        %v364 = vpack.c.b16 %v339, %v338
        %v365 = vpack.c.b16 %v341, %v340
        %v366 = vpack.c.b16 %v343, %v342
        %v367 = vpack.c.b16 %v345, %v344
        %v368 = vpack.c.b16 %v347, %v346
        %v369 = vpack.c.b16 %v349, %v348
        %v370 = vpack.c.b16 %v351, %v350
        %v371 = vpack.c.b16 %v353, %v352
        %v372 = vpack.c.b16 %v355, %v354
        %v373 = vpack.c.b16 %v357, %v356
        %390 = vmatprep.subr.bf16.mxu0 0
        %391 = vmatpush1.bf16.msra.mxu0 %v365
        %392 = vmatprep.subr.bf16.mxu0 0
        %393 = vmatpush1.bf16.msra.mxu0 %v364
        %394 = vmatprep.subr.bf16.mxu0 0
        %395 = vmatpush1.bf16.msra.mxu0 %v363
        %396 = vmatprep.subr.bf16.mxu0 0
        %397 = vmatpush1.bf16.msra.mxu0 %v362
        %398 = vmatprep.subr.bf16.mxu0 0
        %399 = vmatpush1.bf16.msra.mxu0 %v361
        %400 = vmatprep.subr.bf16.mxu0 0
        %401 = vmatpush1.bf16.msra.mxu0 %v360
        %402 = vmatprep.subr.bf16.mxu0 0
        %403 = vmatpush1.bf16.msra.mxu0 %v359
        %404 = vmatprep.subr.bf16.mxu0 0
        %405 = vmatpush1.bf16.msra.mxu0 %v358
        %406 = vmatprep.subr.bf16.mxu0 0
        %407 = vmatpush2.bf16.msra.mxu0 %v373
        %408 = vmatprep.subr.bf16.mxu0 0
        %409 = vmatpush2.bf16.msra.mxu0 %v372
        %410 = vmatprep.subr.bf16.mxu0 0
        %411 = vmatpush2.bf16.msra.mxu0 %v371
        %412 = vmatprep.subr.bf16.mxu0 0
        %413 = vmatpush2.bf16.msra.mxu0 %v370
        %414 = vmatprep.subr.bf16.mxu0 0
        %415 = vmatpush2.bf16.msra.mxu0 %v369
        %416 = vmatprep.subr.bf16.mxu0 0
        %417 = vmatpush2.bf16.msra.mxu0 %v368
        %418 = vmatprep.subr.bf16.mxu0 0
        %419 = vmatpush2.bf16.msra.mxu0 %v367
        %420 = vmatprep.subr.bf16.mxu0 0
        %421 = vmatpush2.bf16.msra.mxu0 %v366
        %422 = vmatprep.mubr.bf16.mxu0 %v291
        %423 = vmatmul.mubr.bf16.gmra.mxu0 %v290
        %v424 = vpop.f32.mrf.mxu0
        %v425 = vadd.f32 %v282, %v424
        %v426 = vpop.f32.mrf.mxu0
        %v427 = vpop.f32.mrf.mxu0
        %v428 = vadd.f32 %v282, %v427
        %v429 = vpop.f32.mrf.mxu0
        %430 = vdwg.mxu0
        %431 = vst [vmem:[%s230] sm:$0xff] %v425
        %432 = vst [vmem:[%s230 + $0x8] sm:$0xff] %v428
        %s433 = sand.u32 %s120, 1
        %s434 = scalar_lea.sflag [#allocation4], %s433
        %s435 = sand.u32 %s120, 1
        %s436 = smul.addr %s435, 16
        %s437 = scalar_lea.vmem [#allocation5], %s436
        // Predicated region
        $region37: #{_column_parallel_forward.1} parent=31 // pred_check
          %p438 = pneg %p130
        $region38: #{_column_parallel_forward.1} parent=31 // pred_check_branch
          %440 = sbr.rel (%p438) target = $region40
        $region39: #{_column_parallel_forward.1} parent=31 // pred_region
          %s441 = smul.u32 2, %s24
          %s443 = ssub.s32 256, 256
          %444 = vsyncadd %s434, %s443
          %s445 = smul.addr %s441, 2
          %s446 = sadd.s32 %s25, %s445
          %s447 = smul.addr %s446, 128
          %s448 = scalar_lea.hbm %s3, %s447
          %s449 = sshll.u32 %s437, 4
          %s450 = int_to_ptr.vmem [resolvable:$true] %s449
          %455 = dma.vmem_to_hbm [thread:$0]  %s450, 256, %s448, %s434, 128, 256, 8
        $region40: #{_column_parallel_forward.1} parent=31 // pred_fallthru
          _
      $region32: #{_column_parallel_forward.1} parent=5 // pred_fallthru
        _
      %p456 = scmp.le.s32.totalorder 2, %s15
      // Predicated region
      $region41: #{_column_parallel_forward.1} parent=5 // pred_check
        %p457 = pneg %p456
      $region42: #{_column_parallel_forward.1} parent=5 // pred_check_branch
        %459 = sbr.rel (%p457) target = $region44
      $region43: #{_column_parallel_forward.1} parent=5 // pred_region
        %s460 = ssub.s32 %s15, 2
        // Predicated region
        $region45: #{_column_parallel_forward.1} parent=43 // pred_check
          %p461 = pneg %p136
        $region46: #{_column_parallel_forward.1} parent=43 // pred_check_branch
          %463 = sbr.rel (%p461) target = $region48
        $region47: #{_column_parallel_forward.1} parent=43 // pred_region
          %s464 = sand.u32 %s121, 1
          %s465 = scalar_lea.sflag [#allocation4], %s464
          %s466 = sand.u32 %s121, 1
          %s467 = smul.addr %s466, 16
          %s468 = scalar_lea.vmem [#allocation5], %s467
          %469 = dma.done %s465, 256
        $region48: #{_column_parallel_forward.1} parent=43 // pred_fallthru
          _
      $region44: #{_column_parallel_forward.1} parent=5 // pred_fallthru
        _
    $region6: #{_column_parallel_forward.1} parent=1 // loop_footer
      %s19 = sadd.s32 1, %s15
    $region7: #{_column_parallel_forward.1} parent=1 // loop_footer_branch
      %14 = sbr.rel target = $region3
    $region8: #{_column_parallel_forward.1} parent=1 // loop_exit
      _
    %470 = vsyncpa [#allocation3], 1
    %s471 = scalar_lea.sflag [#allocation3], 1
    %472 = vsyncpa %s471, 1
    %473 = vsyncpa [#allocation4], 1
    %s474 = scalar_lea.sflag [#allocation4], 1
    %475 = vsyncpa %s474, 1

</llo_original>
